<compile_context>
chip_gen: v7x
topology: tpu7x:2x2x1
jax: 0.10.0
libtpu: 0.0.40
codegen_flags: <defaults>
</compile_context>

<pallas_src>
import jax
import jax.numpy as jnp
from jax.experimental import pallas as pl
from jax.experimental.pallas import tpu as pltpu


def _round_up(x, n):
    return ((x + n - 1) // n) * n


def _cdiv(a, b):
    return -(-a // b)


# ---------------------------------------------------------------------------
# Kernels
# ---------------------------------------------------------------------------

def _mlp_kernel_fused(x_ref, w1_ref, b1_ref, w2_ref, b2_ref, o_ref):
    """grid = (row_tiles,). Weights/biases are grid-invariant (fetched once)."""
    h = jnp.dot(x_ref[...], w1_ref[...], preferred_element_type=jnp.float32)
    h = jnp.maximum(h + b1_ref[...], 0.0)
    o_ref[...] = (jnp.dot(h.astype(w2_ref.dtype), w2_ref[...],
                          preferred_element_type=jnp.float32)
                  + b2_ref[...]).astype(o_ref.dtype)


def _mlp_kernel_chunked(x_ref, w1_ref, b1_ref, w2_ref, b2_ref, o_ref, acc_ref):
    """grid = (row_tiles, hidden_tiles); hidden axis is a reduction ("arbitrary")."""
    j = pl.program_id(1)

    @pl.when(j == 0)
    def _init():
        acc_ref[...] = jnp.zeros_like(acc_ref)

    h = jnp.dot(x_ref[...], w1_ref[...], preferred_element_type=jnp.float32)
    h = jnp.maximum(h + b1_ref[...], 0.0)
    acc_ref[...] += jnp.dot(h.astype(w2_ref.dtype), w2_ref[...],
                            preferred_element_type=jnp.float32)

    @pl.when(j == pl.num_programs(1) - 1)
    def _finalize():
        o_ref[...] = (acc_ref[...] + b2_ref[...]).astype(o_ref.dtype)


# ---------------------------------------------------------------------------
# VMEM budgeting (static, Python-int arithmetic)
# ---------------------------------------------------------------------------

_VMEM_LIMIT_BYTES = 48 * 1024 * 1024   # safe on v7x (64 MiB physical per TC)
_VMEM_BUDGET_BYTES = 40 * 1024 * 1024  # sizing budget, headroom for Mosaic scratch


def _resident_bytes(rt, in_f, hid_p, out_p):
    bf16, f32 = 2, 4
    x_blk = 2 * rt * in_f * bf16                # double-buffered bf16 activation rows
    w1 = 2 * in_f * hid_p * bf16                # count both pipeline buffers
    w2 = 2 * hid_p * out_p * bf16
    b = 2 * (hid_p + out_p) * f32
    out_blk = 2 * rt * out_p * f32
    h_tmp = rt * hid_p * (f32 + bf16)           # f32 intermediate + bf16 cast for dot2
    return x_blk + w1 + w2 + b + out_blk + h_tmp


def _chunked_bytes(rt, ht, in_f, out_p):
    bf16, f32 = 2, 4
    x_blk = 2 * rt * in_f * bf16
    w1 = 2 * in_f * ht * bf16
    w2 = 2 * ht * out_p * bf16
    b = 2 * (ht + out_p) * f32
    out_blk = 2 * rt * out_p * f32
    acc = rt * out_p * f32
    h_tmp = rt * ht * (f32 + bf16)
    return x_blk + w1 + w2 + b + out_blk + acc + h_tmp


# ---------------------------------------------------------------------------
# Wrapper
# ---------------------------------------------------------------------------

def mlp_embedding(x, w1, b1, w2, b2, *, row_tile=256, hidden_tile=512,
                  compute_dtype=jnp.bfloat16):
    """Linear(in, 4*out) -> ReLU -> Linear(4*out, out) as one Pallas kernel.

    x: (..., in_features) f32
    w1: (in_features, hidden), b1: (hidden,)
    w2: (hidden, out_features), b2: (out_features,)
    """
    in_features = x.shape[-1]
    hidden = w1.shape[1]
    out_features = w2.shape[1]
    lead_shape = x.shape[:-1]
    out_dtype = x.dtype

    # Cast x once in the wrapper: halves x HBM traffic, removes in-kernel VPU cast.
    x2d = x.reshape(-1, in_features).astype(compute_dtype)
    m = x2d.shape[0]

    # ---- row tiling: big tiles for MXU/pipeline efficiency, clamped to row count ----
    rt = max(8, min(row_tile, _round_up(m, 8)))
    n_rows = _cdiv(m, rt)
    # v7x megacore: make sure both TensorCores get work when there is enough of it.
    if n_rows == 1 and m > 8:
        rt = _round_up(_cdiv(m, 2), 8)
        n_rows = _cdiv(m, rt)

    # ---- lane padding of hidden and output dims (lane-dense stores, full MXU N) ----
    hidden_p = _round_up(hidden, 128)
    out_p = _round_up(out_features, 128)

    # ---- residency decision: keep full bf16 W1/W2 in VMEM if they fit the budget ----
    resident = _resident_bytes(rt, in_features, hidden_p, out_p) <= _VMEM_BUDGET_BYTES

    if resident:
        ht, n_h = hidden_p, 1
    else:
        ht = max(128, min(_round_up(hidden_tile, 128), hidden_p))
        while ht > 128 and _chunked_bytes(rt, ht, in_features, out_p) > _VMEM_BUDGET_BYTES:
            ht -= 128
        while rt > 8 and _chunked_bytes(rt, ht, in_features, out_p) > _VMEM_BUDGET_BYTES:
            rt = max(8, _round_up(rt // 2, 8))
        n_rows = _cdiv(m, rt)
        n_h = _cdiv(hidden_p, ht)
        hidden_p = ht * n_h   # zero-padded region contributes exactly zero

    # ---- pad weights / biases ----
    if hidden_p != hidden:
        w1 = jnp.pad(w1, ((0, 0), (0, hidden_p - hidden)))
        b1 = jnp.pad(b1, ((0, hidden_p - hidden),))
        w2 = jnp.pad(w2, ((0, hidden_p - hidden), (0, 0)))
    if out_p != out_features:
        w2 = jnp.pad(w2, ((0, 0), (0, out_p - out_features)))
        b2 = jnp.pad(b2, ((0, out_p - out_features),))

    w1c = w1.astype(compute_dtype)
    w2c = w2.astype(compute_dtype)
    b1_2d = b1.reshape(1, hidden_p).astype(jnp.float32)
    b2_2d = b2.reshape(1, out_p).astype(jnp.float32)

    if resident:
        out = pl.pallas_call(
            _mlp_kernel_fused,
            out_shape=jax.ShapeDtypeStruct((m, out_p), out_dtype),
            grid_spec=pltpu.PrefetchScalarGridSpec(
                num_scalar_prefetch=0,
                grid=(n_rows,),
                in_specs=[
                    pl.BlockSpec((rt, in_features), lambda i: (i, 0)),       # x rows
                    pl.BlockSpec((in_features, hidden_p), lambda i: (0, 0)),  # w1 (resident)
                    pl.BlockSpec((1, hidden_p), lambda i: (0, 0)),            # b1 (resident)
                    pl.BlockSpec((hidden_p, out_p), lambda i: (0, 0)),        # w2 (resident)
                    pl.BlockSpec((1, out_p), lambda i: (0, 0)),               # b2 (resident)
                ],
                out_specs=pl.BlockSpec((rt, out_p), lambda i: (i, 0)),
            ),
            compiler_params=pltpu.CompilerParams(
                dimension_semantics=("parallel",),
                vmem_limit_bytes=_VMEM_LIMIT_BYTES,
            ),
        )(x2d, w1c, b1_2d, w2c, b2_2d)
    else:
        out = pl.pallas_call(
            _mlp_kernel_chunked,
            out_shape=jax.ShapeDtypeStruct((m, out_p), out_dtype),
            grid_spec=pltpu.PrefetchScalarGridSpec(
                num_scalar_prefetch=0,
                grid=(n_rows, n_h),
                in_specs=[
                    pl.BlockSpec((rt, in_features), lambda i, j: (i, 0)),   # x rows
                    pl.BlockSpec((in_features, ht), lambda i, j: (0, j)),   # w1 chunk
                    pl.BlockSpec((1, ht), lambda i, j: (0, j)),             # b1 chunk
                    pl.BlockSpec((ht, out_p), lambda i, j: (j, 0)),         # w2 chunk
                    pl.BlockSpec((1, out_p), lambda i, j: (0, 0)),          # b2
                ],
                out_specs=pl.BlockSpec((rt, out_p), lambda i, j: (i, 0)),
                scratch_shapes=[pltpu.VMEM((rt, out_p), jnp.float32)],
            ),
            compiler_params=pltpu.CompilerParams(
                dimension_semantics=("parallel", "arbitrary"),
                vmem_limit_bytes=_VMEM_LIMIT_BYTES,
            ),
        )(x2d, w1c, b1_2d, w2c, b2_2d)

    if out_p != out_features:
        out = out[:, :out_features]
    return out.reshape(*lead_shape, out_features)


def init_params(key, in_features, out_features, dtype=jnp.float32):
    """Mimic nn.Linear's uniform(-1/sqrt(fan_in), 1/sqrt(fan_in)) init."""
    hidden = out_features * 4
    k1, k2, k3, k4 = jax.random.split(key, 4)
    bound1 = 1.0 / (in_features ** 0.5)
    bound2 = 1.0 / (hidden ** 0.5)
    w1 = jax.random.uniform(k1, (in_features, hidden), dtype, -bound1, bound1)
    b1 = jax.random.uniform(k2, (hidden,), dtype, -bound1, bound1)
    w2 = jax.random.uniform(k3, (hidden, out_features), dtype, -bound2, bound2)
    b2 = jax.random.uniform(k4, (out_features,), dtype, -bound2, bound2)
    return w1, b1, w2, b2


if __name__ == "__main__":
    key = jax.random.PRNGKey(0)
    kx, kp = jax.random.split(key)

    batch, seq, in_features, out_features = 2, 8, 16, 32
    x = jax.random.normal(kx, (batch, seq, in_features), dtype=jnp.float32)
    w1, b1, w2, b2 = init_params(kp, in_features, out_features)

    y = jax.block_until_ready(mlp_embedding(x, w1, b1, w2, b2))

    # Reference with the same numeric scheme (bf16 MXU inputs, f32 accumulation).
    hp = jax.lax.Precision.HIGHEST
    xb = x.astype(jnp.bfloat16).astype(jnp.float32)
    w1b = w1.astype(jnp.bfloat16).astype(jnp.float32)
    w2b = w2.astype(jnp.bfloat16).astype(jnp.float32)
    h_ref = jnp.maximum(jnp.matmul(xb, w1b, precision=hp) + b1, 0.0)
    h_ref = h_ref.astype(jnp.bfloat16).astype(jnp.float32)
    ref = jnp.matmul(h_ref, w2b, precision=hp) + b2

    assert y.shape == (batch, seq, out_features)
    assert jnp.allclose(y, ref, atol=2e-3, rtol=2e-3), float(jnp.max(jnp.abs(y - ref)))

    print("KERNEL_OK")
</pallas_src>

<mosaic_0001>
module attributes {stable_mosaic.version = 11 : i64} {
  func.func @_mlp_kernel_fused(%arg0: i32, %arg1: memref<8x16xbf16, #tpu.memory_space<vmem>>, %arg2: memref<16x128xbf16, #tpu.memory_space<vmem>>, %arg3: memref<1x128xf32, #tpu.memory_space<vmem>>, %arg4: memref<128x128xbf16, #tpu.memory_space<vmem>>, %arg5: memref<1x128xf32, #tpu.memory_space<vmem>>, %arg6: memref<8x128xf32, #tpu.memory_space<vmem>>) attributes {dimension_semantics = [#tpu.dimension_semantics<parallel>], iteration_bounds = array<i64: 2>, scalar_prefetch = 0 : i64, scratch_operands = 0 : i64, tpu.core_type = #tpu.core_type<tc>, window_params = [{transform_indices = @transform_0, window_bounds = array<i64: 8, 16>}, {pipeline_mode = #tpu.pipeline_mode<synchronous>, transform_indices = @transform_1, window_bounds = array<i64: 16, 128>}, {pipeline_mode = #tpu.pipeline_mode<synchronous>, transform_indices = @transform_2, window_bounds = array<i64: 1, 128>}, {pipeline_mode = #tpu.pipeline_mode<synchronous>, transform_indices = @transform_3, window_bounds = array<i64: 128, 128>}, {pipeline_mode = #tpu.pipeline_mode<synchronous>, transform_indices = @transform_4, window_bounds = array<i64: 1, 128>}, {transform_indices = @transform_5, window_bounds = array<i64: 8, 128>}]} {
    %c0 = arith.constant 0 : index
    %c0_0 = arith.constant 0 : index
    %0 = vector.load %arg1[%c0, %c0_0] : memref<8x16xbf16, #tpu.memory_space<vmem>>, vector<8x16xbf16>
    %c0_1 = arith.constant 0 : index
    %c0_2 = arith.constant 0 : index
    %1 = vector.load %arg2[%c0_1, %c0_2] : memref<16x128xbf16, #tpu.memory_space<vmem>>, vector<16x128xbf16>
    %cst = arith.constant dense<0.000000e+00> : vector<8x128xf32>
    %2 = tpu.matmul %0, %1, %cst {dimension_numbers = #tpu.dot_dimension_numbers<[1], [0], [0], [1], [0, 0, 1, 1], [], []>} : vector<8x16xbf16>, vector<16x128xbf16>, vector<8x128xf32> -> vector<8x128xf32>
    %c0_3 = arith.constant 0 : index
    %c0_4 = arith.constant 0 : index
    %3 = vector.load %arg3[%c0_3, %c0_4] : memref<1x128xf32, #tpu.memory_space<vmem>>, vector<1x128xf32>
    %4 = vector.broadcast %3 : vector<1x128xf32> to vector<8x128xf32>
    %5 = arith.addf %2, %4 : vector<8x128xf32>
    %cst_5 = arith.constant 0.000000e+00 : f32
    %6 = vector.broadcast %cst_5 : f32 to vector<8x128xf32>
    %7 = arith.maximumf %5, %6 : vector<8x128xf32>
    %8 = arith.truncf %7 : vector<8x128xf32> to vector<8x128xbf16>
    %c0_6 = arith.constant 0 : index
    %c0_7 = arith.constant 0 : index
    %9 = vector.load %arg4[%c0_6, %c0_7] : memref<128x128xbf16, #tpu.memory_space<vmem>>, vector<128x128xbf16>
    %cst_8 = arith.constant dense<0.000000e+00> : vector<8x128xf32>
    %10 = tpu.matmul %8, %9, %cst_8 {dimension_numbers = #tpu.dot_dimension_numbers<[1], [0], [0], [1], [0, 0, 1, 1], [], []>} : vector<8x128xbf16>, vector<128x128xbf16>, vector<8x128xf32> -> vector<8x128xf32>
    %c0_9 = arith.constant 0 : index
    %c0_10 = arith.constant 0 : index
    %11 = vector.load %arg5[%c0_9, %c0_10] : memref<1x128xf32, #tpu.memory_space<vmem>>, vector<1x128xf32>
    %12 = vector.broadcast %11 : vector<1x128xf32> to vector<8x128xf32>
    %13 = arith.addf %10, %12 : vector<8x128xf32>
    %c0_11 = arith.constant 0 : index
    %c0_12 = arith.constant 0 : index
    %14 = vector.load %arg6[%c0_11, %c0_12] : memref<8x128xf32, #tpu.memory_space<vmem>>, vector<8x128xf32>
    tpu.vector_store %arg6[%c0_11, %c0_12], %13 {strides = array<i32>} : memref<8x128xf32, #tpu.memory_space<vmem>>, vector<8x128xf32>,
    return
  }
  func.func @transform_0(%arg0: i32) -> (i32, i32) {
    %c0_i32 = arith.constant 0 : i32
    %c0_i32_0 = arith.constant 0 : i32
    return %arg0, %c0_i32 : i32, i32
  }
  func.func @transform_1(%arg0: i32) -> (i32, i32) {
    %c0_i32 = arith.constant 0 : i32
    %c0_i32_0 = arith.constant 0 : i32
    %c0_i32_1 = arith.constant 0 : i32
    return %c0_i32, %c0_i32_0 : i32, i32
  }
  func.func @transform_2(%arg0: i32) -> (i32, i32) {
    %c0_i32 = arith.constant 0 : i32
    %c0_i32_0 = arith.constant 0 : i32
    %c0_i32_1 = arith.constant 0 : i32
    return %c0_i32, %c0_i32_0 : i32, i32
  }
  func.func @transform_3(%arg0: i32) -> (i32, i32) {
    %c0_i32 = arith.constant 0 : i32
    %c0_i32_0 = arith.constant 0 : i32
    %c0_i32_1 = arith.constant 0 : i32
    return %c0_i32, %c0_i32_0 : i32, i32
  }
  func.func @transform_4(%arg0: i32) -> (i32, i32) {
    %c0_i32 = arith.constant 0 : i32
    %c0_i32_0 = arith.constant 0 : i32
    %c0_i32_1 = arith.constant 0 : i32
    return %c0_i32, %c0_i32_0 : i32, i32
  }
  func.func @transform_5(%arg0: i32) -> (i32, i32) {
    %c0_i32 = arith.constant 0 : i32
    %c0_i32_0 = arith.constant 0 : i32
    return %arg0, %c0_i32 : i32, i32
  }
}

</mosaic_0001>

<llo_original>
// kernel: tpu_custom_call.1
$region0: #{tpu_custom_call.1}
  #allocation0 [shape = 'u32[]', space=smem, size = 0x4, offset = 0x4, fixed_abs, tag = 'smem constant byte address 0x4 - core index']
  #allocation1 [shape = 'u32[144,128]{1,0:T(1,128)}', space=vmem, size = 0x12000, scoped, tag = 'internal scratch']
  %s0 = inlined_call_operand.hbm [shape: bf16[16,16], index: 0, kind: input, shape index: {}]
  %s1 = inlined_call_operand.hbm [shape: bf16[16,128], index: 1, kind: input, shape index: {}]
  %s2 = inlined_call_operand.vmem [shape: f32[1,128], index: 2, kind: input, shape index: {}]
  %s3 = inlined_call_operand.hbm [shape: bf16[128,128], index: 3, kind: input, shape index: {}]
  %s4 = inlined_call_operand.vmem [shape: f32[1,128], index: 4, kind: input, shape index: {}]
  %s5 = inlined_call_operand.hbm [shape: f32[16,128], index: 5, kind: output, shape index: {}]
  %s6 = sld [smem:[#allocation0]]
  $region65: #{tpu_custom_call.1} parent=0
    _
  %s8 = ssub.s32 1, %s6
  %s9 = scalar_select 0, %s8, %s6
  $region1: #{tpu_custom_call.1} parent=0
    #allocation2 [shape = 'u8[4096]{0}', space=vmem, size = 0x1000, scoped, tag = 'input window, operand 0']
    #allocation3 [shape = 's32[2]{0}', space=sflag, size = 0x8, scoped, tag = 'scoped memory for tpu_custom_call.1']
    #allocation4 [shape = 's32[2]{0}', space=sflag, size = 0x8, scoped, tag = 'scoped memory for tpu_custom_call.1']
    #allocation5 [shape = 'u8[4096]{0}', space=vmem, size = 0x1000, scoped, tag = 'input window, operand 1, single buffered']
    #allocation6 [shape = 's32[1]{0}', space=sflag, size = 0x4, scoped, tag = 'scoped memory for tpu_custom_call.1']
    #allocation7 [shape = 'u8[32768]{0}', space=vmem, size = 0x8000, scoped, tag = 'input window, operand 3, single buffered']
    #allocation8 [shape = 'u8[8192]{0}', space=vmem, size = 0x2000, scoped, tag = 'output window, operand 0']
    %10 = vsyncpa [#allocation3], 0
    %s11 = scalar_lea.sflag [#allocation3], 1
    %12 = vsyncpa %s11, 0
    %13 = vsyncpa [#allocation6], 0
    %14 = vsyncpa [#allocation4], 0
    %s15 = scalar_lea.sflag [#allocation4], 1
    %16 = vsyncpa %s15, 0
    loop: start=0, step=1, limit=4
    $region2: #{tpu_custom_call.1} parent=1 // loop_pre_header
      _
    $region3: #{tpu_custom_call.1} parent=1 // loop_header
      %s18 = sphi 0, %s22
      %p19 = scmp.ge.s32.totalorder %s18, 4
      %s28 = sphi 0, %s30
      %s31 = sphi 0, %s28
      %s32 = sphi 0, %s31
      %s48 = sphi 0, %s32
      %s52 = sphi 0, %s52
      %s54 = sphi 0, %s52
      %s55 = sphi 0, %s54
      %s69 = sphi 0, %s55
      %s73 = sphi 0, %s73
      %s75 = sphi 0, %s73
      %s76 = sphi 0, %s75
      %s90 = sphi 0, %s76
      %s94 = sphi 0, %s94
      %s96 = sphi 0, %s94
      %s97 = sphi 0, %s96
      %s111 = sphi 0, %s97
      %s115 = sphi 0, %s115
      %s117 = sphi 0, %s115
      %s118 = sphi 0, %s117
      %s132 = sphi 0, %s118
      %s138 = sphi 0, %s140
      %s141 = sphi 0, %s138
      %s142 = sphi 0, %s141
      %s158 = sphi 0, %s142
    $region4: #{tpu_custom_call.1} parent=1 // loop_header_branch
      %21 = sbr.rel (%p19) target = $region8
    $region5: #{tpu_custom_call.1} parent=1 // loop_body
      %s23 = ssub.s32 %s18, 1
      %s24 = ssub.s32 %s18, 2
      %s25 = sadd.s32 %s18, 1
      %s26 = ssub.s32 %s18, %s25
      %p27 = scmp.eq.s32.totalorder %s26, 0
      %s29 = sadd.s32 %s28, 1
      %s30 = scalar_select %p27, %s28, %s29
      %p33 = pneg %p27
      %p34 = scmp.eq.s32.totalorder %s18, 1
      %p35 = por %p33, %p34
      %p36 = scmp.ne.s32.totalorder %s28, %s31
      %p37 = scmp.eq.s32.totalorder %s18, 0
      %p38 = por %p36, %p37
      %p39 = scmp.ne.s32.totalorder %s28, %s31
      %p40 = scmp.eq.s32.totalorder %s23, 1
      %p41 = por %p39, %p40
      %p42 = scmp.ne.s32.totalorder %s31, %s32
      %p43 = scmp.eq.s32.totalorder %s23, 0
      %p44 = por %p42, %p43
      %p45 = scmp.ne.s32.totalorder %s31, %s32
      %p46 = scmp.eq.s32.totalorder %s24, 1
      %p47 = por %p45, %p46
      %p49 = scmp.ne.s32.totalorder %s32, %s48
      %p50 = scmp.eq.s32.totalorder %s24, 0
      %p51 = por %p49, %p50
      %s53 = sadd.s32 %s52, 1
      %p56 = scmp.eq.s32.totalorder %s18, 1
      %p57 = scmp.ne.s32.totalorder %s52, %s54
      %p58 = scmp.eq.s32.totalorder %s18, 0
      %p59 = por %p57, %p58
      %p60 = scmp.ne.s32.totalorder %s52, %s54
      %p61 = scmp.eq.s32.totalorder %s23, 1
      %p62 = por %p60, %p61
      %p63 = scmp.ne.s32.totalorder %s54, %s55
      %p64 = scmp.eq.s32.totalorder %s23, 0
      %p65 = por %p63, %p64
      %p66 = scmp.ne.s32.totalorder %s54, %s55
      %p67 = scmp.eq.s32.totalorder %s24, 1
      %p68 = por %p66, %p67
      %p70 = scmp.ne.s32.totalorder %s55, %s69
      %p71 = scmp.eq.s32.totalorder %s24, 0
      %p72 = por %p70, %p71
      %s74 = sadd.s32 %s73, 1
      %p77 = scmp.eq.s32.totalorder %s18, 1
      %p78 = scmp.ne.s32.totalorder %s73, %s75
      %p79 = scmp.eq.s32.totalorder %s18, 0
      %p80 = por %p78, %p79
      %p81 = scmp.ne.s32.totalorder %s73, %s75
      %p82 = scmp.eq.s32.totalorder %s23, 1
      %p83 = por %p81, %p82
      %p84 = scmp.ne.s32.totalorder %s75, %s76
      %p85 = scmp.eq.s32.totalorder %s23, 0
      %p86 = por %p84, %p85
      %p87 = scmp.ne.s32.totalorder %s75, %s76
      %p88 = scmp.eq.s32.totalorder %s24, 1
      %p89 = por %p87, %p88
      %p91 = scmp.ne.s32.totalorder %s76, %s90
      %p92 = scmp.eq.s32.totalorder %s24, 0
      %p93 = por %p91, %p92
      %s95 = sadd.s32 %s94, 1
      %p98 = scmp.eq.s32.totalorder %s18, 1
      %p99 = scmp.ne.s32.totalorder %s94, %s96
      %p100 = scmp.eq.s32.totalorder %s18, 0
      %p101 = por %p99, %p100
      %p102 = scmp.ne.s32.totalorder %s94, %s96
      %p103 = scmp.eq.s32.totalorder %s23, 1
      %p104 = por %p102, %p103
      %p105 = scmp.ne.s32.totalorder %s96, %s97
      %p106 = scmp.eq.s32.totalorder %s23, 0
      %p107 = por %p105, %p106
      %p108 = scmp.ne.s32.totalorder %s96, %s97
      %p109 = scmp.eq.s32.totalorder %s24, 1
      %p110 = por %p108, %p109
      %p112 = scmp.ne.s32.totalorder %s97, %s111
      %p113 = scmp.eq.s32.totalorder %s24, 0
      %p114 = por %p112, %p113
      %s116 = sadd.s32 %s115, 1
      %p119 = scmp.eq.s32.totalorder %s18, 1
      %p120 = scmp.ne.s32.totalorder %s115, %s117
      %p121 = scmp.eq.s32.totalorder %s18, 0
      %p122 = por %p120, %p121
      %p123 = scmp.ne.s32.totalorder %s115, %s117
      %p124 = scmp.eq.s32.totalorder %s23, 1
      %p125 = por %p123, %p124
      %p126 = scmp.ne.s32.totalorder %s117, %s118
      %p127 = scmp.eq.s32.totalorder %s23, 0
      %p128 = por %p126, %p127
      %p129 = scmp.ne.s32.totalorder %s117, %s118
      %p130 = scmp.eq.s32.totalorder %s24, 1
      %p131 = por %p129, %p130
      %p133 = scmp.ne.s32.totalorder %s118, %s132
      %p134 = scmp.eq.s32.totalorder %s24, 0
      %p135 = por %p133, %p134
      %s136 = ssub.s32 %s18, %s25
      %p137 = scmp.eq.s32.totalorder %s136, 0
      %s139 = sadd.s32 %s138, 1
      %s140 = scalar_select %p137, %s138, %s139
      %p143 = pneg %p137
      %p144 = scmp.eq.s32.totalorder %s18, 1
      %p145 = por %p143, %p144
      %p146 = scmp.ne.s32.totalorder %s138, %s141
      %p147 = scmp.eq.s32.totalorder %s18, 0
      %p148 = por %p146, %p147
      %p149 = scmp.ne.s32.totalorder %s138, %s141
      %p150 = scmp.eq.s32.totalorder %s23, 1
      %p151 = por %p149, %p150
      %p152 = scmp.ne.s32.totalorder %s141, %s142
      %p153 = scmp.eq.s32.totalorder %s23, 0
      %p154 = por %p152, %p153
      %p155 = scmp.ne.s32.totalorder %s141, %s142
      %p156 = scmp.eq.s32.totalorder %s24, 1
      %p157 = por %p155, %p156
      %p159 = scmp.ne.s32.totalorder %s142, %s158
      %p160 = scmp.eq.s32.totalorder %s24, 0
      %p161 = por %p159, %p160
      %p162 = scmp.le.s32.totalorder 1, %s18
      %p163 = scmp.lt.s32.totalorder %s18, 3
      %p164 = pnand %p162, %p163
      %p165 = pneg %p164
      // Predicated region
      $region9: #{tpu_custom_call.1} parent=5 // pred_check
        _
      $region10: #{tpu_custom_call.1} parent=5 // pred_check_branch
        %167 = sbr.rel (%p164) target = $region12
      $region11: #{tpu_custom_call.1} parent=5 // pred_region
        %s168 = ssub.s32 %s18, 1
        // Predicated region
        $region13: #{tpu_custom_call.1} parent=11 // pred_check
          %p169 = pneg %p65
        $region14: #{tpu_custom_call.1} parent=11 // pred_check_branch
          %171 = sbr.rel (%p169) target = $region16
        $region15: #{tpu_custom_call.1} parent=11 // pred_region
          %s173 = ssub.s32 128, 128
          %174 = vsyncadd [#allocation6], %s173
          %s175 = sshll.u32 [#allocation5], 4
          %s176 = int_to_ptr.vmem [resolvable:$true] %s175
          %181 = dma.hbm_to_vmem [thread:$0]  %s1, 128, %s176, [#allocation6], 64, 64, 4
        $region16: #{tpu_custom_call.1} parent=11 // pred_fallthru
          _
        // Predicated region
        $region17: #{tpu_custom_call.1} parent=11 // pred_check
          %p182 = pneg %p86
        $region18: #{tpu_custom_call.1} parent=11 // pred_check_branch
          %184 = sbr.rel (%p182) target = $region20
        $region19: #{tpu_custom_call.1} parent=11 // pred_region
          _
        $region20: #{tpu_custom_call.1} parent=11 // pred_fallthru
          _
        // Predicated region
        $region21: #{tpu_custom_call.1} parent=11 // pred_check
          %p185 = pneg %p107
        $region22: #{tpu_custom_call.1} parent=11 // pred_check_branch
          %187 = sbr.rel (%p185) target = $region24
        $region23: #{tpu_custom_call.1} parent=11 // pred_region
          %s189 = ssub.s32 1024, 1024
          %190 = vsyncadd [#allocation6], %s189
          %s191 = sshll.u32 [#allocation7], 4
          %s192 = int_to_ptr.vmem [resolvable:$true] %s191
          %197 = dma.hbm_to_vmem [thread:$0]  %s3, 1024, %s192, [#allocation6], 64, 64, 4
        $region24: #{tpu_custom_call.1} parent=11 // pred_fallthru
          _
        // Predicated region
        $region25: #{tpu_custom_call.1} parent=11 // pred_check
          %p198 = pneg %p128
        $region26: #{tpu_custom_call.1} parent=11 // pred_check_branch
          %200 = sbr.rel (%p198) target = $region28
        $region27: #{tpu_custom_call.1} parent=11 // pred_region
          _
        $region28: #{tpu_custom_call.1} parent=11 // pred_fallthru
          _
      $region12: #{tpu_custom_call.1} parent=5 // pred_fallthru
        _
      %p201 = scmp.lt.s32.totalorder %s18, 2
      // Predicated region
      $region29: #{tpu_custom_call.1} parent=5 // pred_check
        %p202 = pneg %p201
      $region30: #{tpu_custom_call.1} parent=5 // pred_check_branch
        %204 = sbr.rel (%p202) target = $region32
      $region31: #{tpu_custom_call.1} parent=5 // pred_region
        // Predicated region
        $region33: #{tpu_custom_call.1} parent=31 // pred_check
          %p205 = pneg %p38
        $region34: #{tpu_custom_call.1} parent=31 // pred_check_branch
          %207 = sbr.rel (%p205) target = $region36
        $region35: #{tpu_custom_call.1} parent=31 // pred_region
          %s208 = sand.u32 %s28, 1
          %s209 = scalar_lea.sflag [#allocation3], %s208
          %s210 = sand.u32 %s28, 1
          %s211 = smul.addr %s210, 4
          %s212 = scalar_lea.vmem [#allocation2], %s211
          %s214 = ssub.s32 64, 64
          %215 = vsyncadd %s209, %s214
          %s216 = smul.addr %s18, 64
          %s217 = scalar_lea.hbm %s0, %s216
          %s219 = sshll.u32 %s212, 4
          %s220 = int_to_ptr.vmem [resolvable:$true] %s219
          %222 = dma.hbm_to_vmem [thread:$0]  %s217, 64, %s220, %s209
        $region36: #{tpu_custom_call.1} parent=31 // pred_fallthru
          _
      $region32: #{tpu_custom_call.1} parent=5 // pred_fallthru
        _
      %p223 = scmp.le.s32.totalorder 1, %s18
      %p224 = scmp.lt.s32.totalorder %s18, 3
      %p225 = pnand %p223, %p224
      %p226 = pneg %p225
      // Predicated region
      $region37: #{tpu_custom_call.1} parent=5 // pred_check
        _
      $region38: #{tpu_custom_call.1} parent=5 // pred_check_branch
        %228 = sbr.rel (%p225) target = $region40
      $region39: #{tpu_custom_call.1} parent=5 // pred_region
        %s229 = ssub.s32 %s18, 1
        %s230 = sand.u32 %s31, 1
        %s231 = scalar_lea.sflag [#allocation3], %s230
        %s232 = sand.u32 %s31, 1
        %s233 = smul.addr %s232, 4
        %s234 = scalar_lea.vmem [#allocation2], %s233
        // Predicated region
        $region41: #{tpu_custom_call.1} parent=39 // pred_check
          %p235 = pneg %p44
        $region42: #{tpu_custom_call.1} parent=39 // pred_check_branch
          %237 = sbr.rel (%p235) target = $region44
        $region43: #{tpu_custom_call.1} parent=39 // pred_region
          %238 = dma.done %s231, 64
        $region44: #{tpu_custom_call.1} parent=39 // pred_fallthru
          _
        // Predicated region
        $region45: #{tpu_custom_call.1} parent=39 // pred_check
          %p239 = pneg %p65
        $region46: #{tpu_custom_call.1} parent=39 // pred_check_branch
          %241 = sbr.rel (%p239) target = $region48
        $region47: #{tpu_custom_call.1} parent=39 // pred_region
          %242 = dma.done [#allocation6], 128
        $region48: #{tpu_custom_call.1} parent=39 // pred_fallthru
          _
        // Predicated region
        $region49: #{tpu_custom_call.1} parent=39 // pred_check
          %p243 = pneg %p107
        $region50: #{tpu_custom_call.1} parent=39 // pred_check_branch
          %245 = sbr.rel (%p243) target = $region52
        $region51: #{tpu_custom_call.1} parent=39 // pred_region
          %246 = dma.done [#allocation6], 1024
        $region52: #{tpu_custom_call.1} parent=39 // pred_fallthru
          _
        %s247 = sand.u32 %s31, 1
        %s248 = scalar_lea.sflag [#allocation3], %s247
        %s249 = sand.u32 %s31, 1
        %s250 = smul.addr %s249, 4
        %s251 = scalar_lea.vmem [#allocation2], %s250
        %p252 = pneg %p44
        %p253 = pneg %p41
        %p254 = pneg %p65
        %p255 = pneg %p62
        %p256 = pneg %p86
        %p257 = pneg %p83
        %p258 = pneg %p107
        %p259 = pneg %p104
        %p260 = pneg %p128
        %p261 = pneg %p125
        %p262 = pneg %p154
        %p263 = pneg %p151
        %s264 = sand.u32 %s141, 1
        %s265 = scalar_lea.sflag [#allocation4], %s264
        %s266 = sand.u32 %s141, 1
        %s267 = smul.addr %s266, 8
        %s268 = scalar_lea.vmem [#allocation8], %s267
        %v270 = vld [vmem:[%s234] sm:$0xf]
        %v271 = vld [vmem:[#allocation5] sm:$0xf]
        %v272 = vld [vmem:[#allocation5 + $0x4] sm:$0xf]
        %v273 = vld [vmem:[%s2] sm:$0x1]
        %v275 = vlaneseq
        %v276 = vshrl.u32 %v275, 7
        %v277 = vsub.s32 0, %v276
        %v278 = vrot.slane %v273, %v277
        %v282 = vunpack.c.l.b16 %v271
        %v283 = vunpack.c.l.b16 %v272
        %v284 = vpack.c.b16 %v283, %v282
        %vm286 = vcmask 130048
        %v288 = vsel %vm286, %v270, 0
        %290 = vmatprep.subr.bf16.mxu0 0
        %291 = vmatpush1.bf16.msra.mxu0 %v284
        %292 = vmatprep.subr.bf16.mxu0 0
        %293 = vmatpush1.bf16.msra.mxu0 0
        %294 = vmatprep.subr.bf16.mxu0 0
        %295 = vmatpush1.bf16.msra.mxu0 0
        %296 = vmatprep.subr.bf16.mxu0 0
        %297 = vmatpush1.bf16.msra.mxu0 0
        %298 = vmatprep.subr.bf16.mxu0 0
        %299 = vmatpush1.bf16.msra.mxu0 0
        %300 = vmatprep.subr.bf16.mxu0 0
        %301 = vmatpush1.bf16.msra.mxu0 0
        %302 = vmatprep.subr.bf16.mxu0 0
        %303 = vmatpush1.bf16.msra.mxu0 0
        %304 = vmatprep.subr.bf16.mxu0 0
        %305 = vmatpush1.bf16.msra.mxu0 0
        %306 = vmatprep.subr.bf16.mxu0 0
        %307 = vmatpush1.bf16.msra.mxu0 0
        %308 = vmatprep.subr.bf16.mxu0 0
        %309 = vmatpush1.bf16.msra.mxu0 0
        %310 = vmatprep.subr.bf16.mxu0 0
        %311 = vmatpush1.bf16.msra.mxu0 0
        %312 = vmatprep.subr.bf16.mxu0 0
        %313 = vmatpush1.bf16.msra.mxu0 0
        %314 = vmatprep.subr.bf16.mxu0 0
        %315 = vmatpush1.bf16.msra.mxu0 0
        %316 = vmatprep.subr.bf16.mxu0 0
        %317 = vmatpush1.bf16.msra.mxu0 0
        %318 = vmatprep.subr.bf16.mxu0 0
        %319 = vmatpush1.bf16.msra.mxu0 0
        %320 = vmatprep.subr.bf16.mxu0 0
        %321 = vmatpush1.bf16.msra.mxu0 0
        %322 = vmatprep.mubr.bf16.mxu0 0
        %323 = vmatmul.mubr.bf16.gmra.mrb[0].mxu0 %v288
        %v324 = vpop.f32.mrb[0].mxu0
        %v325 = vadd.f32 %v278, %v324
        %v326 = vpop.f32.mrb[0].mxu0
        %v327 = vpop.f32.mrb[0].mxu0
        %v328 = vpop.f32.mrb[0].mxu0
        %329 = vdwg.mxu0
        %v330 = vmax.f32 %v325, 0.0
        %v331 = vpack.c.bf16 %v330, %v330
        %v332 = vld [vmem:[#allocation7] sm:$0xf]
        %v333 = vld [vmem:[#allocation7 + $0x4] sm:$0xf]
        %v334 = vld [vmem:[#allocation7 + $0x8] sm:$0xf]
        %v335 = vld [vmem:[#allocation7 + $0xc] sm:$0xf]
        %v336 = vld [vmem:[#allocation7 + $0x10] sm:$0xf]
        %v337 = vld [vmem:[#allocation7 + $0x14] sm:$0xf]
        %v338 = vld [vmem:[#allocation7 + $0x18] sm:$0xf]
        %v339 = vld [vmem:[#allocation7 + $0x1c] sm:$0xf]
        %v340 = vld [vmem:[#allocation7 + $0x20] sm:$0xf]
        %v341 = vld [vmem:[#allocation7 + $0x24] sm:$0xf]
        %v342 = vld [vmem:[#allocation7 + $0x28] sm:$0xf]
        %v343 = vld [vmem:[#allocation7 + $0x2c] sm:$0xf]
        %v344 = vld [vmem:[#allocation7 + $0x30] sm:$0xf]
        %v345 = vld [vmem:[#allocation7 + $0x34] sm:$0xf]
        %v346 = vld [vmem:[#allocation7 + $0x38] sm:$0xf]
        %v347 = vld [vmem:[#allocation7 + $0x3c] sm:$0xf]
        %v348 = vld [vmem:[%s4] sm:$0x1]
        %v350 = vlaneseq
        %v351 = vshrl.u32 %v350, 7
        %v352 = vsub.s32 0, %v351
        %v353 = vrot.slane %v348, %v352
        %v371 = vunpack.c.l.b16 %v332
        %v372 = vunpack.c.l.b16 %v333
        %v373 = vunpack.c.l.b16 %v334
        %v374 = vunpack.c.l.b16 %v335
        %v375 = vunpack.c.l.b16 %v336
        %v376 = vunpack.c.l.b16 %v337
        %v377 = vunpack.c.l.b16 %v338
        %v378 = vunpack.c.l.b16 %v339
        %v379 = vunpack.c.l.b16 %v340
        %v380 = vunpack.c.l.b16 %v341
        %v381 = vunpack.c.l.b16 %v342
        %v382 = vunpack.c.l.b16 %v343
        %v383 = vunpack.c.l.b16 %v344
        %v384 = vunpack.c.l.b16 %v345
        %v385 = vunpack.c.l.b16 %v346
        %v386 = vunpack.c.l.b16 %v347
        %v387 = vpack.c.b16 %v372, %v371
        %v388 = vpack.c.b16 %v374, %v373
        %v389 = vpack.c.b16 %v376, %v375
        %v390 = vpack.c.b16 %v378, %v377
        %v391 = vpack.c.b16 %v380, %v379
        %v392 = vpack.c.b16 %v382, %v381
        %v393 = vpack.c.b16 %v384, %v383
        %v394 = vpack.c.b16 %v386, %v385
        %403 = vmatprep.subr.bf16.mxu0 0
        %404 = vmatpush1.bf16.msra.mxu0 %v387
        %405 = vmatprep.subr.bf16.mxu0 0
        %406 = vmatpush1.bf16.msra.mxu0 %v388
        %407 = vmatprep.subr.bf16.mxu0 0
        %408 = vmatpush1.bf16.msra.mxu0 %v389
        %409 = vmatprep.subr.bf16.mxu0 0
        %410 = vmatpush1.bf16.msra.mxu0 %v390
        %411 = vmatprep.subr.bf16.mxu0 0
        %412 = vmatpush1.bf16.msra.mxu0 %v391
        %413 = vmatprep.subr.bf16.mxu0 0
        %414 = vmatpush1.bf16.msra.mxu0 %v392
        %415 = vmatprep.subr.bf16.mxu0 0
        %416 = vmatpush1.bf16.msra.mxu0 %v393
        %417 = vmatprep.subr.bf16.mxu0 0
        %418 = vmatpush1.bf16.msra.mxu0 %v394
        %419 = vmatprep.subr.bf16.mxu0 0
        %420 = vmatpush1.bf16.msra.mxu0 0
        %421 = vmatprep.subr.bf16.mxu0 0
        %422 = vmatpush1.bf16.msra.mxu0 0
        %423 = vmatprep.subr.bf16.mxu0 0
        %424 = vmatpush1.bf16.msra.mxu0 0
        %425 = vmatprep.subr.bf16.mxu0 0
        %426 = vmatpush1.bf16.msra.mxu0 0
        %427 = vmatprep.subr.bf16.mxu0 0
        %428 = vmatpush1.bf16.msra.mxu0 0
        %429 = vmatprep.subr.bf16.mxu0 0
        %430 = vmatpush1.bf16.msra.mxu0 0
        %431 = vmatprep.subr.bf16.mxu0 0
        %432 = vmatpush1.bf16.msra.mxu0 0
        %433 = vmatprep.subr.bf16.mxu0 0
        %434 = vmatpush1.bf16.msra.mxu0 0
        %435 = vmatprep.mubr.bf16.mxu0 0
        %436 = vmatmul.mubr.bf16.gmra.mrb[0].mxu0 %v331
        %v437 = vpop.f32.mrb[0].mxu0
        %v438 = vadd.f32 %v353, %v437
        %v439 = vpop.f32.mrb[0].mxu0
        %v440 = vpop.f32.mrb[0].mxu0
        %v441 = vpop.f32.mrb[0].mxu0
        %442 = vdwg.mxu0
        %443 = vst [vmem:[%s268] sm:$0xff] %v438
        %s444 = sand.u32 %s141, 1
        %s445 = scalar_lea.sflag [#allocation4], %s444
        %s446 = sand.u32 %s141, 1
        %s447 = smul.addr %s446, 8
        %s448 = scalar_lea.vmem [#allocation8], %s447
        // Predicated region
        $region53: #{tpu_custom_call.1} parent=39 // pred_check
          %p449 = pneg %p151
        $region54: #{tpu_custom_call.1} parent=39 // pred_check_branch
          %451 = sbr.rel (%p449) target = $region56
        $region55: #{tpu_custom_call.1} parent=39 // pred_region
          %s453 = ssub.s32 128, 128
          %454 = vsyncadd %s445, %s453
          %s455 = smul.addr %s23, 128
          %s456 = scalar_lea.hbm %s5, %s455
          %s458 = sshll.u32 %s448, 4
          %s459 = int_to_ptr.vmem [resolvable:$true] %s458
          %461 = dma.vmem_to_hbm [thread:$0]  %s459, 128, %s456, %s445
        $region56: #{tpu_custom_call.1} parent=39 // pred_fallthru
          _
      $region40: #{tpu_custom_call.1} parent=5 // pred_fallthru
        _
      %p462 = scmp.le.s32.totalorder 2, %s18
      // Predicated region
      $region57: #{tpu_custom_call.1} parent=5 // pred_check
        %p463 = pneg %p462
      $region58: #{tpu_custom_call.1} parent=5 // pred_check_branch
        %465 = sbr.rel (%p463) target = $region60
      $region59: #{tpu_custom_call.1} parent=5 // pred_region
        %s466 = ssub.s32 %s18, 2
        // Predicated region
        $region61: #{tpu_custom_call.1} parent=59 // pred_check
          %p467 = pneg %p157
        $region62: #{tpu_custom_call.1} parent=59 // pred_check_branch
          %469 = sbr.rel (%p467) target = $region64
        $region63: #{tpu_custom_call.1} parent=59 // pred_region
          %s470 = sand.u32 %s142, 1
          %s471 = scalar_lea.sflag [#allocation4], %s470
          %s472 = sand.u32 %s142, 1
          %s473 = smul.addr %s472, 8
          %s474 = scalar_lea.vmem [#allocation8], %s473
          %475 = dma.done %s471, 128
        $region64: #{tpu_custom_call.1} parent=59 // pred_fallthru
          _
      $region60: #{tpu_custom_call.1} parent=5 // pred_fallthru
        _
    $region6: #{tpu_custom_call.1} parent=1 // loop_footer
      %s22 = sadd.s32 1, %s18
    $region7: #{tpu_custom_call.1} parent=1 // loop_footer_branch
      %17 = sbr.rel target = $region3
    $region8: #{tpu_custom_call.1} parent=1 // loop_exit
      _
    %476 = vsyncpa [#allocation3], 1
    %s477 = scalar_lea.sflag [#allocation3], 1
    %478 = vsyncpa %s477, 1
    %479 = vsyncpa [#allocation6], 1
    %480 = vsyncpa [#allocation4], 1
    %s481 = scalar_lea.sflag [#allocation4], 1
    %482 = vsyncpa %s481, 1

</llo_original>
